<compile_context>
chip_gen: v6e
topology: v6e:2x2x1
jax: 0.10.0
libtpu: 0.0.40
codegen_flags: <defaults>
</compile_context>

<pallas_src>
import functools

import jax
import jax.numpy as jnp
import numpy as np
from jax import lax
from jax.experimental import pallas as pl
from jax.experimental.pallas import tpu as pltpu


def _asblock_fused_kernel(x_ref, *rest, dilations, pads, pad_max, K, H, W, Wp):
    """Fused multi-dilation conv for one batch element.

    x_ref : (1, Cin, FLAT)             zero-padded image, spatial flattened
    rest  : n_d weight refs (Cout_d, K*K*Cin)   im2col-ordered weights,
            s_ref (H*Wp, H*W)           0/1 crop/selection matrix,
            o_ref (1, Cout_total, H*W)  output tile.
    """
    n_d = len(dilations)
    w_refs = rest[:n_d]
    s_ref = rest[n_d]
    o_ref = rest[n_d + 1]
    hwp = H * Wp

    group_outs = []
    for w_ref, d, pad_d in zip(w_refs, dilations, pads):
        off = pad_max - pad_d                        # shift into the shared pad
        taps = []
        for kh in range(K):
            for kw in range(K):
                start = (kh * d + off) * Wp + (kw * d + off)
                taps.append(x_ref[0, :, start:start + hwp])     # (Cin, H*Wp)
        cols = jnp.concatenate(taps, axis=0)                    # (K*K*Cin, H*Wp)
        # One wide MXU matmul per dilation branch.
        group_outs.append(jnp.dot(w_ref[...], cols,
                                  preferred_element_type=jnp.float32))
    acc = jnp.concatenate(group_outs, axis=0)                   # (Cout_tot, H*Wp)

    # Drop the W-halo garbage columns with a single 0/1 selection matmul.  This
    # keeps everything lane-dense and avoids an in-kernel (.., H, Wp)->(.., H*W)
    # relayout; the store below is a full-width unmasked tile.
    out = jnp.dot(acc, s_ref[...], preferred_element_type=jnp.float32)
    o_ref[0] = out.astype(o_ref.dtype)


def asblock_forward(x_nchw, weights_oihw, dilations):
    """ASBlock.forward: channel-concat of dilated 'same' convs (no bias).

    x_nchw: (N, Cin, H, W);  weights_oihw: list of (Cout_i, Cin, K, K).
    """
    N, Cin, H, W = x_nchw.shape
    K = int(weights_oihw[0].shape[2])
    couts = [int(w.shape[0]) for w in weights_oihw]
    cout_total = sum(couts)
    pads = [(K + (K - 1) * (d - 1) - 1) // 2 for d in dilations]
    pad_max = max(pads)
    Wp = W + 2 * pad_max

    # Largest flat tap offset -> extra zero rows at the bottom so every shifted
    # slice of length H*Wp stays in bounds.
    max_start = 0
    for d, pad_d in zip(dilations, pads):
        off = pad_max - pad_d
        max_start = max(max_start,
                        ((K - 1) * d + off) * Wp + (K - 1) * d + off)
    tail = max(0, max_start + H * Wp - (H + 2 * pad_max) * Wp)
    extra_rows = -(-tail // Wp)

    # One shared zero-pad for all branches, then a free reshape to the
    # flattened-spatial layout (spatial -> 128-lane axis).
    xp = jnp.pad(x_nchw, ((0, 0), (0, 0),
                          (pad_max, pad_max + extra_rows),
                          (pad_max, pad_max)))
    flat_len = (H + 2 * pad_max + extra_rows) * Wp
    xf = xp.reshape(N, Cin, flat_len)

    # Weights OIHW -> (Cout, K*K*Cin), (kh, kw, cin) order to match the im2col.
    # (x / w could be cast to bfloat16 here for native-rate MXU if the accuracy
    #  budget allows; kept in the input dtype for the f32 check below.)
    w_flat = [jnp.transpose(w, (0, 2, 3, 1)).reshape(co, K * K * Cin)
              for w, co in zip(weights_oihw, couts)]

    # 0/1 selection matrix: flat padded column (h*Wp + w) -> valid column h*W+w.
    q = jnp.arange(H * W)
    src = (q // W) * Wp + (q % W)
    sel = (jnp.arange(H * Wp)[:, None] == src[None, :]).astype(jnp.float32)

    kernel = functools.partial(
        _asblock_fused_kernel, dilations=tuple(dilations), pads=tuple(pads),
        pad_max=pad_max, K=K, H=H, W=W, Wp=Wp)

    # TODO(synk): for large H*W / Cin, add a spatial grid axis with halo blocks
    # so per-step VMEM stays under v7x's 64 MiB and both TensorCores get >1
    # grid step to pipeline; full-image blocks are right at this toy size.
    out = pl.pallas_call(
        kernel,
        out_shape=jax.ShapeDtypeStruct((N, cout_total, H * W), x_nchw.dtype),
        grid_spec=pltpu.PrefetchScalarGridSpec(
            num_scalar_prefetch=0,
            grid=(N,),
            in_specs=(
                [pl.BlockSpec((1, Cin, flat_len), lambda n: (n, 0, 0))]
                + [pl.BlockSpec((co, K * K * Cin), lambda n: (0, 0))
                   for co in couts]
                + [pl.BlockSpec((H * Wp, H * W), lambda n: (0, 0))]),
            out_specs=pl.BlockSpec((1, cout_total, H * W),
                                   lambda n: (n, 0, 0)),
        ),
        compiler_params=pltpu.CompilerParams(
            dimension_semantics=("parallel",)),
    )(xf, *w_flat, sel)

    return out.reshape(N, cout_total, H, W)   # free: already NCHW-ordered


def _reference_forward(x_nchw, weights_oihw, dilations):
    """Pure-JAX reference (lax conv) for a correctness check."""
    outs = []
    for w, d in zip(weights_oihw, dilations):
        K = w.shape[2]
        pad = (K + (K - 1) * (d - 1) - 1) // 2
        outs.append(lax.conv_general_dilated(
            x_nchw, w, window_strides=(1, 1),
            padding=((pad, pad), (pad, pad)),
            rhs_dilation=(d, d),
            dimension_numbers=("NCHW", "OIHW", "NCHW")))
    return jnp.concatenate(outs, axis=1)


if __name__ == "__main__":
    # Small, deterministic config consistent with ASBlock(4, 4, 3, dilation=[1, 2]).
    N, Cin, H, W = 2, 4, 16, 16
    K = 3
    dilations = [1, 2]
    out_channels = [4, 4]

    key = jax.random.PRNGKey(0)
    kx, *kws = jax.random.split(key, 1 + len(dilations))
    x = jax.random.normal(kx, (N, Cin, H, W), dtype=jnp.float32)

    # Deterministic kaiming-normal-like init (leaky_relu, a=0.1), no bias.
    a = 0.1
    gain = float(np.sqrt(2.0 / (1.0 + a * a)))
    std = gain / float(np.sqrt(Cin * K * K))
    weights = [
        std * jax.random.normal(kw, (co, Cin, K, K), dtype=jnp.float32)
        for kw, co in zip(kws, out_channels)
    ]

    y = jax.block_until_ready(asblock_forward(x, weights, dilations))
    y_ref = jax.block_until_ready(_reference_forward(x, weights, dilations))

    assert y.shape == (N, sum(out_channels), H, W), y.shape
    np.testing.assert_allclose(np.asarray(y), np.asarray(y_ref),
                               rtol=1e-4, atol=1e-4)

    print("KERNEL_OK")
</pallas_src>

<mosaic_0001>
module attributes {stable_mosaic.version = 11 : i64} {
  func.func @_asblock_fused_kernel(%arg0: i32, %arg1: memref<1x4x420xf32, #tpu.memory_space<vmem>>, %arg2: memref<4x36xf32, #tpu.memory_space<vmem>>, %arg3: memref<4x36xf32, #tpu.memory_space<vmem>>, %arg4: memref<320x256xf32, #tpu.memory_space<vmem>>, %arg5: memref<1x8x256xf32, #tpu.memory_space<vmem>>) attributes {dimension_semantics = [#tpu.dimension_semantics<parallel>], iteration_bounds = array<i64: 2>, scalar_prefetch = 0 : i64, scratch_operands = 0 : i64, tpu.core_type = #tpu.core_type<tc>, window_params = [{transform_indices = @transform_0, window_bounds = array<i64: 1, 4, 420>}, {pipeline_mode = #tpu.pipeline_mode<synchronous>, transform_indices = @transform_1, window_bounds = array<i64: 4, 36>}, {pipeline_mode = #tpu.pipeline_mode<synchronous>, transform_indices = @transform_2, window_bounds = array<i64: 4, 36>}, {pipeline_mode = #tpu.pipeline_mode<synchronous>, transform_indices = @transform_3, window_bounds = array<i64: 320, 256>}, {transform_indices = @transform_4, window_bounds = array<i64: 1, 8, 256>}]} {
    %c0 = arith.constant 0 : index
    %c0_0 = arith.constant 0 : index
    %c21 = arith.constant 21 : index
    %0 = vector.load %arg1[%c0, %c0_0, %c21] : memref<1x4x420xf32, #tpu.memory_space<vmem>>, vector<1x4x320xf32>
    %1 = vector.shape_cast %0 : vector<1x4x320xf32> to vector<4x320xf32>
    %c0_1 = arith.constant 0 : index
    %c0_2 = arith.constant 0 : index
    %c22 = arith.constant 22 : index
    %2 = vector.load %arg1[%c0_1, %c0_2, %c22] : memref<1x4x420xf32, #tpu.memory_space<vmem>>, vector<1x4x320xf32>
    %3 = vector.shape_cast %2 : vector<1x4x320xf32> to vector<4x320xf32>
    %c0_3 = arith.constant 0 : index
    %c0_4 = arith.constant 0 : index
    %c23 = arith.constant 23 : index
    %4 = vector.load %arg1[%c0_3, %c0_4, %c23] : memref<1x4x420xf32, #tpu.memory_space<vmem>>, vector<1x4x320xf32>
    %5 = vector.shape_cast %4 : vector<1x4x320xf32> to vector<4x320xf32>
    %c0_5 = arith.constant 0 : index
    %c0_6 = arith.constant 0 : index
    %c41 = arith.constant 41 : index
    %6 = vector.load %arg1[%c0_5, %c0_6, %c41] : memref<1x4x420xf32, #tpu.memory_space<vmem>>, vector<1x4x320xf32>
    %7 = vector.shape_cast %6 : vector<1x4x320xf32> to vector<4x320xf32>
    %c0_7 = arith.constant 0 : index
    %c0_8 = arith.constant 0 : index
    %c42 = arith.constant 42 : index
    %8 = vector.load %arg1[%c0_7, %c0_8, %c42] : memref<1x4x420xf32, #tpu.memory_space<vmem>>, vector<1x4x320xf32>
    %9 = vector.shape_cast %8 : vector<1x4x320xf32> to vector<4x320xf32>
    %c0_9 = arith.constant 0 : index
    %c0_10 = arith.constant 0 : index
    %c43 = arith.constant 43 : index
    %10 = vector.load %arg1[%c0_9, %c0_10, %c43] : memref<1x4x420xf32, #tpu.memory_space<vmem>>, vector<1x4x320xf32>
    %11 = vector.shape_cast %10 : vector<1x4x320xf32> to vector<4x320xf32>
    %c0_11 = arith.constant 0 : index
    %c0_12 = arith.constant 0 : index
    %c61 = arith.constant 61 : index
    %12 = vector.load %arg1[%c0_11, %c0_12, %c61] : memref<1x4x420xf32, #tpu.memory_space<vmem>>, vector<1x4x320xf32>
    %13 = vector.shape_cast %12 : vector<1x4x320xf32> to vector<4x320xf32>
    %c0_13 = arith.constant 0 : index
    %c0_14 = arith.constant 0 : index
    %c62 = arith.constant 62 : index
    %14 = vector.load %arg1[%c0_13, %c0_14, %c62] : memref<1x4x420xf32, #tpu.memory_space<vmem>>, vector<1x4x320xf32>
    %15 = vector.shape_cast %14 : vector<1x4x320xf32> to vector<4x320xf32>
    %c0_15 = arith.constant 0 : index
    %c0_16 = arith.constant 0 : index
    %c63 = arith.constant 63 : index
    %16 = vector.load %arg1[%c0_15, %c0_16, %c63] : memref<1x4x420xf32, #tpu.memory_space<vmem>>, vector<1x4x320xf32>
    %17 = vector.shape_cast %16 : vector<1x4x320xf32> to vector<4x320xf32>
    %18 = tpu.concatenate %1, %3, %5, %7, %9, %11, %13, %15, %17 in 0 : vector<4x320xf32>, vector<4x320xf32>, vector<4x320xf32>, vector<4x320xf32>, vector<4x320xf32>, vector<4x320xf32>, vector<4x320xf32>, vector<4x320xf32>, vector<4x320xf32> -> vector<36x320xf32>
    %c0_17 = arith.constant 0 : index
    %c0_18 = arith.constant 0 : index
    %19 = vector.load %arg2[%c0_17, %c0_18] : memref<4x36xf32, #tpu.memory_space<vmem>>, vector<4x36xf32>
    %cst = arith.constant dense<0.000000e+00> : vector<4x320xf32>
    %20 = tpu.matmul %19, %18, %cst {dimension_numbers = #tpu.dot_dimension_numbers<[1], [0], [0], [1], [0, 0, 1, 1], [], []>} : vector<4x36xf32>, vector<36x320xf32>, vector<4x320xf32> -> vector<4x320xf32>
    %c0_19 = arith.constant 0 : index
    %c0_20 = arith.constant 0 : index
    %c0_21 = arith.constant 0 : index
    %21 = vector.load %arg1[%c0_19, %c0_20, %c0_21] : memref<1x4x420xf32, #tpu.memory_space<vmem>>, vector<1x4x320xf32>
    %22 = vector.shape_cast %21 : vector<1x4x320xf32> to vector<4x320xf32>
    %c0_22 = arith.constant 0 : index
    %c0_23 = arith.constant 0 : index
    %c2 = arith.constant 2 : index
    %23 = vector.load %arg1[%c0_22, %c0_23, %c2] : memref<1x4x420xf32, #tpu.memory_space<vmem>>, vector<1x4x320xf32>
    %24 = vector.shape_cast %23 : vector<1x4x320xf32> to vector<4x320xf32>
    %c0_24 = arith.constant 0 : index
    %c0_25 = arith.constant 0 : index
    %c4 = arith.constant 4 : index
    %25 = vector.load %arg1[%c0_24, %c0_25, %c4] : memref<1x4x420xf32, #tpu.memory_space<vmem>>, vector<1x4x320xf32>
    %26 = vector.shape_cast %25 : vector<1x4x320xf32> to vector<4x320xf32>
    %c0_26 = arith.constant 0 : index
    %c0_27 = arith.constant 0 : index
    %c40 = arith.constant 40 : index
    %27 = vector.load %arg1[%c0_26, %c0_27, %c40] : memref<1x4x420xf32, #tpu.memory_space<vmem>>, vector<1x4x320xf32>
    %28 = vector.shape_cast %27 : vector<1x4x320xf32> to vector<4x320xf32>
    %c0_28 = arith.constant 0 : index
    %c0_29 = arith.constant 0 : index
    %c42_30 = arith.constant 42 : index
    %29 = vector.load %arg1[%c0_28, %c0_29, %c42_30] : memref<1x4x420xf32, #tpu.memory_space<vmem>>, vector<1x4x320xf32>
    %30 = vector.shape_cast %29 : vector<1x4x320xf32> to vector<4x320xf32>
    %c0_31 = arith.constant 0 : index
    %c0_32 = arith.constant 0 : index
    %c44 = arith.constant 44 : index
    %31 = vector.load %arg1[%c0_31, %c0_32, %c44] : memref<1x4x420xf32, #tpu.memory_space<vmem>>, vector<1x4x320xf32>
    %32 = vector.shape_cast %31 : vector<1x4x320xf32> to vector<4x320xf32>
    %c0_33 = arith.constant 0 : index
    %c0_34 = arith.constant 0 : index
    %c80 = arith.constant 80 : index
    %33 = vector.load %arg1[%c0_33, %c0_34, %c80] : memref<1x4x420xf32, #tpu.memory_space<vmem>>, vector<1x4x320xf32>
    %34 = vector.shape_cast %33 : vector<1x4x320xf32> to vector<4x320xf32>
    %c0_35 = arith.constant 0 : index
    %c0_36 = arith.constant 0 : index
    %c82 = arith.constant 82 : index
    %35 = vector.load %arg1[%c0_35, %c0_36, %c82] : memref<1x4x420xf32, #tpu.memory_space<vmem>>, vector<1x4x320xf32>
    %36 = vector.shape_cast %35 : vector<1x4x320xf32> to vector<4x320xf32>
    %c0_37 = arith.constant 0 : index
    %c0_38 = arith.constant 0 : index
    %c84 = arith.constant 84 : index
    %37 = vector.load %arg1[%c0_37, %c0_38, %c84] : memref<1x4x420xf32, #tpu.memory_space<vmem>>, vector<1x4x320xf32>
    %38 = vector.shape_cast %37 : vector<1x4x320xf32> to vector<4x320xf32>
    %39 = tpu.concatenate %22, %24, %26, %28, %30, %32, %34, %36, %38 in 0 : vector<4x320xf32>, vector<4x320xf32>, vector<4x320xf32>, vector<4x320xf32>, vector<4x320xf32>, vector<4x320xf32>, vector<4x320xf32>, vector<4x320xf32>, vector<4x320xf32> -> vector<36x320xf32>
    %c0_39 = arith.constant 0 : index
    %c0_40 = arith.constant 0 : index
    %40 = vector.load %arg3[%c0_39, %c0_40] : memref<4x36xf32, #tpu.memory_space<vmem>>, vector<4x36xf32>
    %cst_41 = arith.constant dense<0.000000e+00> : vector<4x320xf32>
    %41 = tpu.matmul %40, %39, %cst_41 {dimension_numbers = #tpu.dot_dimension_numbers<[1], [0], [0], [1], [0, 0, 1, 1], [], []>} : vector<4x36xf32>, vector<36x320xf32>, vector<4x320xf32> -> vector<4x320xf32>
    %42 = tpu.concatenate %20, %41 in 0 : vector<4x320xf32>, vector<4x320xf32> -> vector<8x320xf32>
    %c0_42 = arith.constant 0 : index
    %c0_43 = arith.constant 0 : index
    %43 = vector.load %arg4[%c0_42, %c0_43] : memref<320x256xf32, #tpu.memory_space<vmem>>, vector<320x256xf32>
    %cst_44 = arith.constant dense<0.000000e+00> : vector<8x256xf32>
    %44 = tpu.matmul %42, %43, %cst_44 {dimension_numbers = #tpu.dot_dimension_numbers<[1], [0], [0], [1], [0, 0, 1, 1], [], []>} : vector<8x320xf32>, vector<320x256xf32>, vector<8x256xf32> -> vector<8x256xf32>
    %c0_45 = arith.constant 0 : index
    %c0_46 = arith.constant 0 : index
    %c0_47 = arith.constant 0 : index
    %45 = vector.load %arg5[%c0_45, %c0_46, %c0_47] : memref<1x8x256xf32, #tpu.memory_space<vmem>>, vector<1x8x256xf32>
    %46 = vector.shape_cast %45 : vector<1x8x256xf32> to vector<8x256xf32>
    %47 = vector.shape_cast %44 : vector<8x256xf32> to vector<1x8x256xf32>
    tpu.vector_store %arg5[%c0_45, %c0_46, %c0_47], %47 {strides = array<i32>} : memref<1x8x256xf32, #tpu.memory_space<vmem>>, vector<1x8x256xf32>,
    return
  }
  func.func @transform_0(%arg0: i32) -> (i32, i32, i32) {
    %c0_i32 = arith.constant 0 : i32
    %c0_i32_0 = arith.constant 0 : i32
    %c0_i32_1 = arith.constant 0 : i32
    return %arg0, %c0_i32, %c0_i32_0 : i32, i32, i32
  }
  func.func @transform_1(%arg0: i32) -> (i32, i32) {
    %c0_i32 = arith.constant 0 : i32
    %c0_i32_0 = arith.constant 0 : i32
    %c0_i32_1 = arith.constant 0 : i32
    return %c0_i32, %c0_i32_0 : i32, i32
  }
  func.func @transform_2(%arg0: i32) -> (i32, i32) {
    %c0_i32 = arith.constant 0 : i32
    %c0_i32_0 = arith.constant 0 : i32
    %c0_i32_1 = arith.constant 0 : i32
    return %c0_i32, %c0_i32_0 : i32, i32
  }
  func.func @transform_3(%arg0: i32) -> (i32, i32) {
    %c0_i32 = arith.constant 0 : i32
    %c0_i32_0 = arith.constant 0 : i32
    %c0_i32_1 = arith.constant 0 : i32
    return %c0_i32, %c0_i32_0 : i32, i32
  }
  func.func @transform_4(%arg0: i32) -> (i32, i32, i32) {
    %c0_i32 = arith.constant 0 : i32
    %c0_i32_0 = arith.constant 0 : i32
    %c0_i32_1 = arith.constant 0 : i32
    return %arg0, %c0_i32, %c0_i32_0 : i32, i32, i32
  }
}

</mosaic_0001>

<llo_original>
// kernel: tpu_custom_call.1
$region0: #{tpu_custom_call.1}
  #allocation0 [shape = 'u32[]', space=smem, size = 0x4, offset = 0x4, fixed_abs, tag = 'smem constant byte address 0x4 - core index']
  #allocation1 [shape = 'u32[144,128]{1,0:T(1,128)}', space=vmem, size = 0x12000, scoped, tag = 'internal scratch']
  %s0 = inlined_call_operand.hbm [shape: f32[2,4,420], index: 0, kind: input, shape index: {}]
  %s1 = inlined_call_operand.hbm [shape: f32[4,36], index: 1, kind: input, shape index: {}]
  %s2 = inlined_call_operand.hbm [shape: f32[4,36], index: 2, kind: input, shape index: {}]
  %s3 = inlined_call_operand.hbm [shape: f32[320,256], index: 3, kind: input, shape index: {}]
  %s4 = inlined_call_operand.hbm [shape: f32[2,8,256], index: 4, kind: output, shape index: {}]
  %s5 = sld [smem:[#allocation0]]
  $region65: #{tpu_custom_call.1} parent=0
    _
  %s7 = ssub.s32 1, %s5
  %s8 = scalar_select 0, %s7, %s5
  $region1: #{tpu_custom_call.1} parent=0
    #allocation2 [shape = 'u8[16384]{0}', space=vmem, size = 0x4000, scoped, tag = 'input window, operand 0']
    #allocation3 [shape = 's32[2]{0}', space=sflag, size = 0x8, scoped, tag = 'scoped memory for tpu_custom_call.1']
    #allocation4 [shape = 's32[2]{0}', space=sflag, size = 0x8, scoped, tag = 'scoped memory for tpu_custom_call.1']
    #allocation5 [shape = 'u8[2048]{0}', space=vmem, size = 0x800, scoped, tag = 'input window, operand 1, single buffered']
    #allocation6 [shape = 's32[1]{0}', space=sflag, size = 0x4, scoped, tag = 'scoped memory for tpu_custom_call.1']
    #allocation7 [shape = 'u8[2048]{0}', space=vmem, size = 0x800, scoped, tag = 'input window, operand 2, single buffered']
    #allocation8 [shape = 'u8[327680]{0}', space=vmem, size = 0x50000, scoped, tag = 'input window, operand 3, single buffered']
    #allocation9 [shape = 's32[1]{0}', space=sflag, size = 0x4, scoped, tag = 'scoped memory for tpu_custom_call.1']
    #allocation10 [shape = 'u8[16384]{0}', space=vmem, size = 0x4000, scoped, tag = 'output window, operand 0']
    %9 = vsyncpa [#allocation3], 0
    %s10 = scalar_lea.sflag [#allocation3], 1
    %11 = vsyncpa %s10, 0
    %12 = vsyncpa [#allocation6], 0
    %13 = vsyncpa [#allocation9], 0
    %14 = vsyncpa [#allocation4], 0
    %s15 = scalar_lea.sflag [#allocation4], 1
    %16 = vsyncpa %s15, 0
    loop: start=0, step=1, limit=4
    $region2: #{tpu_custom_call.1} parent=1 // loop_pre_header
      _
    $region3: #{tpu_custom_call.1} parent=1 // loop_header
      %s18 = sphi 0, %s22
      %p19 = scmp.ge.s32.totalorder %s18, 4
      %s28 = sphi 0, %s30
      %s31 = sphi 0, %s28
      %s32 = sphi 0, %s31
      %s48 = sphi 0, %s32
      %s52 = sphi 0, %s52
      %s54 = sphi 0, %s52
      %s55 = sphi 0, %s54
      %s69 = sphi 0, %s55
      %s73 = sphi 0, %s73
      %s75 = sphi 0, %s73
      %s76 = sphi 0, %s75
      %s90 = sphi 0, %s76
      %s94 = sphi 0, %s94
      %s96 = sphi 0, %s94
      %s97 = sphi 0, %s96
      %s111 = sphi 0, %s97
      %s117 = sphi 0, %s119
      %s120 = sphi 0, %s117
      %s121 = sphi 0, %s120
      %s137 = sphi 0, %s121
    $region4: #{tpu_custom_call.1} parent=1 // loop_header_branch
      %21 = sbr.rel (%p19) target = $region8
    $region5: #{tpu_custom_call.1} parent=1 // loop_body
      %s23 = ssub.s32 %s18, 1
      %s24 = ssub.s32 %s18, 2
      %s25 = sadd.s32 %s18, 1
      %s26 = ssub.s32 %s18, %s25
      %p27 = scmp.eq.s32.totalorder %s26, 0
      %s29 = sadd.s32 %s28, 1
      %s30 = scalar_select %p27, %s28, %s29
      %p33 = pneg %p27
      %p34 = scmp.eq.s32.totalorder %s18, 1
      %p35 = por %p33, %p34
      %p36 = scmp.ne.s32.totalorder %s28, %s31
      %p37 = scmp.eq.s32.totalorder %s18, 0
      %p38 = por %p36, %p37
      %p39 = scmp.ne.s32.totalorder %s28, %s31
      %p40 = scmp.eq.s32.totalorder %s23, 1
      %p41 = por %p39, %p40
      %p42 = scmp.ne.s32.totalorder %s31, %s32
      %p43 = scmp.eq.s32.totalorder %s23, 0
      %p44 = por %p42, %p43
      %p45 = scmp.ne.s32.totalorder %s31, %s32
      %p46 = scmp.eq.s32.totalorder %s24, 1
      %p47 = por %p45, %p46
      %p49 = scmp.ne.s32.totalorder %s32, %s48
      %p50 = scmp.eq.s32.totalorder %s24, 0
      %p51 = por %p49, %p50
      %s53 = sadd.s32 %s52, 1
      %p56 = scmp.eq.s32.totalorder %s18, 1
      %p57 = scmp.ne.s32.totalorder %s52, %s54
      %p58 = scmp.eq.s32.totalorder %s18, 0
      %p59 = por %p57, %p58
      %p60 = scmp.ne.s32.totalorder %s52, %s54
      %p61 = scmp.eq.s32.totalorder %s23, 1
      %p62 = por %p60, %p61
      %p63 = scmp.ne.s32.totalorder %s54, %s55
      %p64 = scmp.eq.s32.totalorder %s23, 0
      %p65 = por %p63, %p64
      %p66 = scmp.ne.s32.totalorder %s54, %s55
      %p67 = scmp.eq.s32.totalorder %s24, 1
      %p68 = por %p66, %p67
      %p70 = scmp.ne.s32.totalorder %s55, %s69
      %p71 = scmp.eq.s32.totalorder %s24, 0
      %p72 = por %p70, %p71
      %s74 = sadd.s32 %s73, 1
      %p77 = scmp.eq.s32.totalorder %s18, 1
      %p78 = scmp.ne.s32.totalorder %s73, %s75
      %p79 = scmp.eq.s32.totalorder %s18, 0
      %p80 = por %p78, %p79
      %p81 = scmp.ne.s32.totalorder %s73, %s75
      %p82 = scmp.eq.s32.totalorder %s23, 1
      %p83 = por %p81, %p82
      %p84 = scmp.ne.s32.totalorder %s75, %s76
      %p85 = scmp.eq.s32.totalorder %s23, 0
      %p86 = por %p84, %p85
      %p87 = scmp.ne.s32.totalorder %s75, %s76
      %p88 = scmp.eq.s32.totalorder %s24, 1
      %p89 = por %p87, %p88
      %p91 = scmp.ne.s32.totalorder %s76, %s90
      %p92 = scmp.eq.s32.totalorder %s24, 0
      %p93 = por %p91, %p92
      %s95 = sadd.s32 %s94, 1
      %p98 = scmp.eq.s32.totalorder %s18, 1
      %p99 = scmp.ne.s32.totalorder %s94, %s96
      %p100 = scmp.eq.s32.totalorder %s18, 0
      %p101 = por %p99, %p100
      %p102 = scmp.ne.s32.totalorder %s94, %s96
      %p103 = scmp.eq.s32.totalorder %s23, 1
      %p104 = por %p102, %p103
      %p105 = scmp.ne.s32.totalorder %s96, %s97
      %p106 = scmp.eq.s32.totalorder %s23, 0
      %p107 = por %p105, %p106
      %p108 = scmp.ne.s32.totalorder %s96, %s97
      %p109 = scmp.eq.s32.totalorder %s24, 1
      %p110 = por %p108, %p109
      %p112 = scmp.ne.s32.totalorder %s97, %s111
      %p113 = scmp.eq.s32.totalorder %s24, 0
      %p114 = por %p112, %p113
      %s115 = ssub.s32 %s18, %s25
      %p116 = scmp.eq.s32.totalorder %s115, 0
      %s118 = sadd.s32 %s117, 1
      %s119 = scalar_select %p116, %s117, %s118
      %p122 = pneg %p116
      %p123 = scmp.eq.s32.totalorder %s18, 1
      %p124 = por %p122, %p123
      %p125 = scmp.ne.s32.totalorder %s117, %s120
      %p126 = scmp.eq.s32.totalorder %s18, 0
      %p127 = por %p125, %p126
      %p128 = scmp.ne.s32.totalorder %s117, %s120
      %p129 = scmp.eq.s32.totalorder %s23, 1
      %p130 = por %p128, %p129
      %p131 = scmp.ne.s32.totalorder %s120, %s121
      %p132 = scmp.eq.s32.totalorder %s23, 0
      %p133 = por %p131, %p132
      %p134 = scmp.ne.s32.totalorder %s120, %s121
      %p135 = scmp.eq.s32.totalorder %s24, 1
      %p136 = por %p134, %p135
      %p138 = scmp.ne.s32.totalorder %s121, %s137
      %p139 = scmp.eq.s32.totalorder %s24, 0
      %p140 = por %p138, %p139
      %p141 = scmp.le.s32.totalorder 1, %s18
      %p142 = scmp.lt.s32.totalorder %s18, 3
      %p143 = pnand %p141, %p142
      %p144 = pneg %p143
      // Predicated region
      $region9: #{tpu_custom_call.1} parent=5 // pred_check
        _
      $region10: #{tpu_custom_call.1} parent=5 // pred_check_branch
        %146 = sbr.rel (%p143) target = $region12
      $region11: #{tpu_custom_call.1} parent=5 // pred_region
        %s147 = ssub.s32 %s18, 1
        // Predicated region
        $region13: #{tpu_custom_call.1} parent=11 // pred_check
          %p148 = pneg %p65
        $region14: #{tpu_custom_call.1} parent=11 // pred_check_branch
          %150 = sbr.rel (%p148) target = $region16
        $region15: #{tpu_custom_call.1} parent=11 // pred_region
          %s152 = ssub.s32 64, 64
          %153 = vsyncadd [#allocation6], %s152
          %s155 = sshll.u32 [#allocation5], 4
          %s156 = int_to_ptr.vmem [resolvable:$true] %s155
          %158 = dma.hbm_to_vmem [thread:$0]  %s1, 64, %s156, [#allocation6]
        $region16: #{tpu_custom_call.1} parent=11 // pred_fallthru
          _
        // Predicated region
        $region17: #{tpu_custom_call.1} parent=11 // pred_check
          %p159 = pneg %p86
        $region18: #{tpu_custom_call.1} parent=11 // pred_check_branch
          %161 = sbr.rel (%p159) target = $region20
        $region19: #{tpu_custom_call.1} parent=11 // pred_region
          %s163 = ssub.s32 64, 64
          %164 = vsyncadd [#allocation6], %s163
          %s166 = sshll.u32 [#allocation7], 4
          %s167 = int_to_ptr.vmem [resolvable:$true] %s166
          %169 = dma.hbm_to_vmem [thread:$0]  %s2, 64, %s167, [#allocation6]
        $region20: #{tpu_custom_call.1} parent=11 // pred_fallthru
          _
        // Predicated region
        $region21: #{tpu_custom_call.1} parent=11 // pred_check
          %p170 = pneg %p107
        $region22: #{tpu_custom_call.1} parent=11 // pred_check_branch
          %172 = sbr.rel (%p170) target = $region24
        $region23: #{tpu_custom_call.1} parent=11 // pred_region
          %s174 = ssub.s32 10240, 10240
          %175 = vsyncadd [#allocation9], %s174
          %s176 = sshll.u32 [#allocation8], 4
          %s177 = int_to_ptr.vmem [resolvable:$true] %s176
          %182 = dma.hbm_to_vmem [thread:$0]  %s3, 10240, %s177, [#allocation9], 256, 256, 16
        $region24: #{tpu_custom_call.1} parent=11 // pred_fallthru
          _
      $region12: #{tpu_custom_call.1} parent=5 // pred_fallthru
        _
      %p183 = scmp.lt.s32.totalorder %s18, 2
      // Predicated region
      $region25: #{tpu_custom_call.1} parent=5 // pred_check
        %p184 = pneg %p183
      $region26: #{tpu_custom_call.1} parent=5 // pred_check_branch
        %186 = sbr.rel (%p184) target = $region28
      $region27: #{tpu_custom_call.1} parent=5 // pred_region
        // Predicated region
        $region29: #{tpu_custom_call.1} parent=27 // pred_check
          %p187 = pneg %p38
        $region30: #{tpu_custom_call.1} parent=27 // pred_check_branch
          %189 = sbr.rel (%p187) target = $region32
        $region31: #{tpu_custom_call.1} parent=27 // pred_region
          %s190 = sand.u32 %s28, 1
          %s191 = scalar_lea.sflag [#allocation3], %s190
          %s192 = sand.u32 %s28, 1
          %s193 = smul.addr %s192, 16
          %s194 = scalar_lea.vmem [#allocation2], %s193
          %s196 = ssub.s32 256, 256
          %197 = vsyncadd %s191, %s196
          %s198 = smul.addr %s18, 4
          %s199 = smul.addr %s198, 64
          %s200 = scalar_lea.hbm %s0, %s199
          %s202 = sshll.u32 %s194, 4
          %s203 = int_to_ptr.vmem [resolvable:$true] %s202
          %205 = dma.hbm_to_vmem [thread:$0]  %s200, 256, %s203, %s191
        $region32: #{tpu_custom_call.1} parent=27 // pred_fallthru
          _
      $region28: #{tpu_custom_call.1} parent=5 // pred_fallthru
        _
      %p206 = scmp.le.s32.totalorder 1, %s18
      %p207 = scmp.lt.s32.totalorder %s18, 3
      %p208 = pnand %p206, %p207
      %p209 = pneg %p208
      // Predicated region
      $region33: #{tpu_custom_call.1} parent=5 // pred_check
        _
      $region34: #{tpu_custom_call.1} parent=5 // pred_check_branch
        %211 = sbr.rel (%p208) target = $region36
      $region35: #{tpu_custom_call.1} parent=5 // pred_region
        %s212 = ssub.s32 %s18, 1
        %s213 = sand.u32 %s31, 1
        %s214 = scalar_lea.sflag [#allocation3], %s213
        %s215 = sand.u32 %s31, 1
        %s216 = smul.addr %s215, 16
        %s217 = scalar_lea.vmem [#allocation2], %s216
        // Predicated region
        $region37: #{tpu_custom_call.1} parent=35 // pred_check
          %p218 = pneg %p44
        $region38: #{tpu_custom_call.1} parent=35 // pred_check_branch
          %220 = sbr.rel (%p218) target = $region40
        $region39: #{tpu_custom_call.1} parent=35 // pred_region
          %221 = dma.done %s214, 256
        $region40: #{tpu_custom_call.1} parent=35 // pred_fallthru
          _
        // Predicated region
        $region41: #{tpu_custom_call.1} parent=35 // pred_check
          %p222 = pneg %p65
        $region42: #{tpu_custom_call.1} parent=35 // pred_check_branch
          %224 = sbr.rel (%p222) target = $region44
        $region43: #{tpu_custom_call.1} parent=35 // pred_region
          %225 = dma.done [#allocation6], 64
        $region44: #{tpu_custom_call.1} parent=35 // pred_fallthru
          _
        // Predicated region
        $region45: #{tpu_custom_call.1} parent=35 // pred_check
          %p226 = pneg %p86
        $region46: #{tpu_custom_call.1} parent=35 // pred_check_branch
          %228 = sbr.rel (%p226) target = $region48
        $region47: #{tpu_custom_call.1} parent=35 // pred_region
          %229 = dma.done [#allocation6], 64
        $region48: #{tpu_custom_call.1} parent=35 // pred_fallthru
          _
        // Predicated region
        $region49: #{tpu_custom_call.1} parent=35 // pred_check
          %p230 = pneg %p107
        $region50: #{tpu_custom_call.1} parent=35 // pred_check_branch
          %232 = sbr.rel (%p230) target = $region52
        $region51: #{tpu_custom_call.1} parent=35 // pred_region
          %233 = dma.done [#allocation9], 10240
        $region52: #{tpu_custom_call.1} parent=35 // pred_fallthru
          _
        %s234 = sand.u32 %s31, 1
        %s235 = scalar_lea.sflag [#allocation3], %s234
        %s236 = sand.u32 %s31, 1
        %s237 = smul.addr %s236, 16
        %s238 = scalar_lea.vmem [#allocation2], %s237
        %p239 = pneg %p44
        %p240 = pneg %p41
        %p241 = pneg %p65
        %p242 = pneg %p62
        %p243 = pneg %p86
        %p244 = pneg %p83
        %p245 = pneg %p107
        %p246 = pneg %p104
        %p247 = pneg %p133
        %p248 = pneg %p130
        %s249 = sand.u32 %s120, 1
        %s250 = scalar_lea.sflag [#allocation4], %s249
        %s251 = sand.u32 %s120, 1
        %s252 = smul.addr %s251, 16
        %s253 = scalar_lea.vmem [#allocation10], %s252
        %v254 = vld [vmem:[%s217] sm:$0xff]
        %v255 = vld [vmem:[%s217 + $0x8] sm:$0xf]
        %v258 = vcombine.high %v254, %v254
        %v260 = vcombine.low %v254, %v254
        %v261 = vcombine.low %v255, %v255
        %262 = vrot.lane.b32.xlu0 %v260, 127
        %v263 = vpop.permute.xlu0 %262
        %264 = vrot.lane.b32.xlu0 %v254, 127
        %v265 = vpop.permute.xlu0 %264
        %266 = vrot.lane.b32.xlu0 %v261, 127
        %v267 = vpop.permute.xlu0 %266
        %vm268 = vcmask 1039360
        %v269 = vsel %vm268, %v263, %v265
        %v270 = vsel %vm268, %v265, %v267
        %274 = vrot.lane.b32.xlu0 %v254, 126
        %v275 = vpop.permute.xlu0 %274
        %276 = vrot.lane.b32.xlu0 %v258, 126
        %v277 = vpop.permute.xlu0 %276
        %278 = vrot.lane.b32.xlu0 %v255, 126
        %v279 = vpop.permute.xlu0 %278
        %vm280 = vcmask 1031168
        %v281 = vsel %vm280, %v275, %v277
        %v282 = vsel %vm280, %v277, %v279
        %286 = vrot.lane.b32.xlu0 %v260, 108
        %v287 = vpop.permute.xlu0 %286
        %288 = vrot.lane.b32.xlu0 %v254, 108
        %v289 = vpop.permute.xlu0 %288
        %290 = vrot.lane.b32.xlu0 %v261, 108
        %v291 = vpop.permute.xlu0 %290
        %vm292 = vcmask 883712
        %v293 = vsel %vm292, %v287, %v289
        %v294 = vsel %vm292, %v289, %v291
        %298 = vrot.lane.b32.xlu0 %v254, 107
        %v299 = vpop.permute.xlu0 %298
        %300 = vrot.lane.b32.xlu0 %v258, 107
        %v301 = vpop.permute.xlu0 %300
        %302 = vrot.lane.b32.xlu0 %v255, 107
        %v303 = vpop.permute.xlu0 %302
        %vm304 = vcmask 875520
        %v305 = vsel %vm304, %v299, %v301
        %v306 = vsel %vm304, %v301, %v303
        %310 = vrot.lane.b32.xlu0 %v260, 106
        %v311 = vpop.permute.xlu0 %310
        %312 = vrot.lane.b32.xlu0 %v254, 106
        %v313 = vpop.permute.xlu0 %312
        %314 = vrot.lane.b32.xlu0 %v261, 106
        %v315 = vpop.permute.xlu0 %314
        %vm316 = vcmask 867328
        %v317 = vsel %vm316, %v311, %v313
        %v318 = vsel %vm316, %v313, %v315
        %322 = vrot.lane.b32.xlu0 %v254, 88
        %v323 = vpop.permute.xlu0 %322
        %324 = vrot.lane.b32.xlu0 %v258, 88
        %v325 = vpop.permute.xlu0 %324
        %326 = vrot.lane.b32.xlu0 %v255, 88
        %v327 = vpop.permute.xlu0 %326
        %vm328 = vcmask 719872
        %v329 = vsel %vm328, %v323, %v325
        %v330 = vsel %vm328, %v325, %v327
        %334 = vrot.lane.b32.xlu0 %v260, 87
        %v335 = vpop.permute.xlu0 %334
        %336 = vrot.lane.b32.xlu0 %v254, 87
        %v337 = vpop.permute.xlu0 %336
        %338 = vrot.lane.b32.xlu0 %v261, 87
        %v339 = vpop.permute.xlu0 %338
        %vm340 = vcmask 711680
        %v341 = vsel %vm340, %v335, %v337
        %v342 = vsel %vm340, %v337, %v339
        %346 = vrot.lane.b32.xlu0 %v254, 86
        %v347 = vpop.permute.xlu0 %346
        %348 = vrot.lane.b32.xlu0 %v258, 86
        %v349 = vpop.permute.xlu0 %348
        %350 = vrot.lane.b32.xlu0 %v255, 86
        %v351 = vpop.permute.xlu0 %350
        %vm352 = vcmask 703488
        %v353 = vsel %vm352, %v347, %v349
        %v354 = vsel %vm352, %v349, %v351
        %vm355 = vcmask 1043456
        %v356 = vsel %vm355, %v254, %v269
        %v357 = vsel %vm355, %v258, %v270
        %v358 = vsel %vm355, %v255, %v267
        %v359 = vsel %vm355, %v281, %v293
        %v360 = vsel %vm355, %v282, %v294
        %v361 = vsel %vm355, %v279, %v291
        %v362 = vsel %vm355, %v305, %v317
        %v363 = vsel %vm355, %v306, %v318
        %v364 = vsel %vm355, %v303, %v315
        %v365 = vsel %vm355, %v329, %v341
        %v366 = vsel %vm355, %v330, %v342
        %v367 = vsel %vm355, %v327, %v339
        %v368 = vld [vmem:[#allocation5] sm:$0xf]
        %381 = vrot.lane.b32.xlu0 %v356, 107
        %v382 = vpop.permute.xlu0 %381
        %383 = vrot.lane.b32.xlu0 %v357, 107
        %v384 = vpop.permute.xlu0 %383
        %385 = vrot.lane.b32.xlu0 %v358, 107
        %v386 = vpop.permute.xlu0 %385
        %387 = vrot.lane.b32.xlu0 %v359, 107
        %v388 = vpop.permute.xlu0 %387
        %389 = vrot.lane.b32.xlu0 %v360, 107
        %v390 = vpop.permute.xlu0 %389
        %391 = vrot.lane.b32.xlu0 %v361, 107
        %v392 = vpop.permute.xlu0 %391
        %393 = vrot.lane.b32.xlu0 %v362, 107
        %v394 = vpop.permute.xlu0 %393
        %395 = vrot.lane.b32.xlu0 %v363, 107
        %v396 = vpop.permute.xlu0 %395
        %397 = vrot.lane.b32.xlu0 %v364, 107
        %v398 = vpop.permute.xlu0 %397
        %399 = vrot.lane.b32.xlu0 %v365, 107
        %v400 = vpop.permute.xlu0 %399
        %401 = vrot.lane.b32.xlu0 %v366, 107
        %v402 = vpop.permute.xlu0 %401
        %403 = vrot.lane.b32.xlu0 %v367, 107
        %v404 = vpop.permute.xlu0 %403
        %405 = vrot.lane.b32.xlu0 %v353, 107
        %v406 = vpop.permute.xlu0 %405
        %407 = vrot.lane.b32.xlu0 %v354, 107
        %v408 = vpop.permute.xlu0 %407
        %409 = vrot.lane.b32.xlu0 %v351, 107
        %v410 = vpop.permute.xlu0 %409
        %v411 = vsel %vm304, %v382, %v384
        %v412 = vsel %vm304, %v384, %v386
        %v413 = vsel %vm304, %v388, %v390
        %v414 = vsel %vm304, %v390, %v392
        %v415 = vsel %vm304, %v394, %v396
        %v416 = vsel %vm304, %v396, %v398
        %v417 = vsel %vm304, %v400, %v402
        %v418 = vsel %vm304, %v402, %v404
        %v419 = vsel %vm304, %v406, %v408
        %v420 = vsel %vm304, %v408, %v410
        %vm433 = vcmask 293888
        %v435 = vsel %vm433, %v368, 0
        %v437 = vsel %vm355, %v419, 0
        %v439 = vsel %vm355, %v420, 0
        %v441 = vsel %vm355, %v410, 0
        %443 = vmatprep.subr.mxu0 0.0
        %444 = vmatpush1.msra.mxu0 0.0
        %445 = vmatprep.subr.mxu0 0.0
        %446 = vmatpush1.msra.mxu0 0.0
        %447 = vmatprep.subr.mxu0 0.0
        %448 = vmatpush1.msra.mxu0 0.0
        %449 = vmatprep.subr.mxu0 0.0
        %450 = vmatpush1.msra.mxu0 0.0
        %451 = vmatprep.subr.mxu0 0.0
        %452 = vmatpush1.msra.mxu0 0.0
        %453 = vmatprep.subr.mxu0 0.0
        %454 = vmatpush1.msra.mxu0 0.0
        %455 = vmatprep.subr.mxu0 0.0
        %456 = vmatpush1.msra.mxu0 0.0
        %457 = vmatprep.subr.mxu0 0.0
        %458 = vmatpush1.msra.mxu0 0.0
        %459 = vmatprep.subr.mxu0 0.0
        %460 = vmatpush1.msra.mxu0 0.0
        %461 = vmatprep.subr.mxu0 0.0
        %462 = vmatpush1.msra.mxu0 0.0
        %463 = vmatprep.subr.mxu0 0.0
        %464 = vmatpush1.msra.mxu0 0.0
        %465 = vmatprep.subr.mxu0 %v439
        %466 = vmatpush1.msra.mxu0 %v437
        %467 = vmatprep.subr.mxu0 %v418
        %468 = vmatpush1.msra.mxu0 %v417
        %469 = vmatprep.subr.mxu0 %v416
        %470 = vmatpush1.msra.mxu0 %v415
        %471 = vmatprep.subr.mxu0 %v414
        %472 = vmatpush1.msra.mxu0 %v413
        %473 = vmatprep.subr.mxu0 %v412
        %474 = vmatpush1.msra.mxu0 %v411
        %475 = vmatprep.subr.mxu0 0.0
        %476 = vmatpush2.msra.mxu0 0.0
        %477 = vmatprep.subr.mxu0 0.0
        %478 = vmatpush2.msra.mxu0 0.0
        %479 = vmatprep.subr.mxu0 0.0
        %480 = vmatpush2.msra.mxu0 0.0
        %481 = vmatprep.subr.mxu0 0.0
        %482 = vmatpush2.msra.mxu0 0.0
        %483 = vmatprep.subr.mxu0 0.0
        %484 = vmatpush2.msra.mxu0 0.0
        %485 = vmatprep.subr.mxu0 0.0
        %486 = vmatpush2.msra.mxu0 0.0
        %487 = vmatprep.subr.mxu0 0.0
        %488 = vmatpush2.msra.mxu0 0.0
        %489 = vmatprep.subr.mxu0 0.0
        %490 = vmatpush2.msra.mxu0 0.0
        %491 = vmatprep.subr.mxu0 0.0
        %492 = vmatpush2.msra.mxu0 0.0
        %493 = vmatprep.subr.mxu0 0.0
        %494 = vmatpush2.msra.mxu0 0.0
        %495 = vmatprep.subr.mxu0 0.0
        %496 = vmatpush2.msra.mxu0 0.0
        %497 = vmatprep.subr.mxu0 0.0
        %498 = vmatpush2.msra.mxu0 0.0
        %499 = vmatprep.subr.mxu0 0.0
        %500 = vmatpush2.msra.mxu0 0.0
        %501 = vmatprep.subr.mxu0 0.0
        %502 = vmatpush2.msra.mxu0 0.0
        %503 = vmatprep.subr.mxu0 0.0
        %504 = vmatpush2.msra.mxu0 0.0
        %505 = vmatprep.subr.mxu0 0.0
        %506 = vmatpush2.msra.mxu0 0.0
        %507 = vmatprep.mubr.f32.mxu0 0.0
        %508 = vmatmul.mubr.f32.gmra.mxu0 %v435
        %v509 = vpop.f32.mrf.mxu0
        %v510 = vadd.f32 0.0, %v509
        %v511 = vpop.f32.mrf.mxu0
        %v512 = vadd.f32 0.0, %v511
        %513 = vdwg.mxu0
        %514 = vmatprep.subr.mxu0 0.0
        %515 = vmatpush1.msra.mxu0 0.0
        %516 = vmatprep.subr.mxu0 0.0
        %517 = vmatpush1.msra.mxu0 0.0
        %518 = vmatprep.subr.mxu0 0.0
        %519 = vmatpush1.msra.mxu0 0.0
        %520 = vmatprep.subr.mxu0 0.0
        %521 = vmatpush1.msra.mxu0 0.0
        %522 = vmatprep.subr.mxu0 0.0
        %523 = vmatpush1.msra.mxu0 0.0
        %524 = vmatprep.subr.mxu0 0.0
        %525 = vmatpush1.msra.mxu0 0.0
        %526 = vmatprep.subr.mxu0 0.0
        %527 = vmatpush1.msra.mxu0 0.0
        %528 = vmatprep.subr.mxu0 0.0
        %529 = vmatpush1.msra.mxu0 0.0
        %530 = vmatprep.subr.mxu0 0.0
        %531 = vmatpush1.msra.mxu0 0.0
        %532 = vmatprep.subr.mxu0 0.0
        %533 = vmatpush1.msra.mxu0 0.0
        %534 = vmatprep.subr.mxu0 0.0
        %535 = vmatpush1.msra.mxu0 0.0
        %536 = vmatprep.subr.mxu0 0.0
        %537 = vmatpush1.msra.mxu0 %v441
        %538 = vmatprep.subr.mxu0 0.0
        %539 = vmatpush1.msra.mxu0 %v404
        %540 = vmatprep.subr.mxu0 0.0
        %541 = vmatpush1.msra.mxu0 %v398
        %542 = vmatprep.subr.mxu0 0.0
        %543 = vmatpush1.msra.mxu0 %v392
        %544 = vmatprep.subr.mxu0 0.0
        %545 = vmatpush1.msra.mxu0 %v386
        %546 = vmatprep.subr.mxu0 0.0
        %547 = vmatpush2.msra.mxu0 0.0
        %548 = vmatprep.subr.mxu0 0.0
        %549 = vmatpush2.msra.mxu0 0.0
        %550 = vmatprep.subr.mxu0 0.0
        %551 = vmatpush2.msra.mxu0 0.0
        %552 = vmatprep.subr.mxu0 0.0
        %553 = vmatpush2.msra.mxu0 0.0
        %554 = vmatprep.subr.mxu0 0.0
        %555 = vmatpush2.msra.mxu0 0.0
        %556 = vmatprep.subr.mxu0 0.0
        %557 = vmatpush2.msra.mxu0 0.0
        %558 = vmatprep.subr.mxu0 0.0
        %559 = vmatpush2.msra.mxu0 0.0
        %560 = vmatprep.subr.mxu0 0.0
        %561 = vmatpush2.msra.mxu0 0.0
        %562 = vmatprep.subr.mxu0 0.0
        %563 = vmatpush2.msra.mxu0 0.0
        %564 = vmatprep.subr.mxu0 0.0
        %565 = vmatpush2.msra.mxu0 0.0
        %566 = vmatprep.subr.mxu0 0.0
        %567 = vmatpush2.msra.mxu0 0.0
        %568 = vmatprep.subr.mxu0 0.0
        %569 = vmatpush2.msra.mxu0 0.0
        %570 = vmatprep.subr.mxu0 0.0
        %571 = vmatpush2.msra.mxu0 0.0
        %572 = vmatprep.subr.mxu0 0.0
        %573 = vmatpush2.msra.mxu0 0.0
        %574 = vmatprep.subr.mxu0 0.0
        %575 = vmatpush2.msra.mxu0 0.0
        %576 = vmatprep.subr.mxu0 0.0
        %577 = vmatpush2.msra.mxu0 0.0
        %578 = vmatprep.mubr.f32.mxu0 0.0
        %579 = vmatmul.mubr.f32.gmra.mxu0 %v435
        %v580 = vpop.f32.mrf.mxu0
        %v581 = vadd.f32 0.0, %v580
        %v582 = vpop.f32.mrf.mxu0
        %583 = vdwg.mxu0
        %v584 = vld [vmem:[%s217] sm:$0xff]
        %v585 = vld [vmem:[%s217 + $0x8] sm:$0xf]
        %v586 = vld [vmem:[%s217 + $0x8] sm:$0xff]
        %v589 = vcombine.high %v584, %v584
        %v591 = vcombine.low %v584, %v584
        %v592 = vcombine.low %v585, %v585
        %593 = vrot.lane.b32.xlu0 %v591, 126
        %v594 = vpop.permute.xlu0 %593
        %595 = vrot.lane.b32.xlu0 %v584, 126
        %v596 = vpop.permute.xlu0 %595
        %597 = vrot.lane.b32.xlu0 %v592, 126
        %v598 = vpop.permute.xlu0 %597
        %v599 = vsel %vm280, %v594, %v596
        %v600 = vsel %vm280, %v596, %v598
        %604 = vrot.lane.b32.xlu0 %v584, 124
        %v605 = vpop.permute.xlu0 %604
        %606 = vrot.lane.b32.xlu0 %v589, 124
        %v607 = vpop.permute.xlu0 %606
        %608 = vrot.lane.b32.xlu0 %v585, 124
        %v609 = vpop.permute.xlu0 %608
        %vm610 = vcmask 1014784
        %v611 = vsel %vm610, %v605, %v607
        %v612 = vsel %vm610, %v607, %v609
        %616 = vrot.lane.b32.xlu0 %v591, 88
        %v617 = vpop.permute.xlu0 %616
        %618 = vrot.lane.b32.xlu0 %v584, 88
        %v619 = vpop.permute.xlu0 %618
        %620 = vrot.lane.b32.xlu0 %v592, 88
        %v621 = vpop.permute.xlu0 %620
        %v622 = vsel %vm328, %v617, %v619
        %v623 = vsel %vm328, %v619, %v621
        %630 = vrot.lane.b32.xlu0 %v591, 84
        %v631 = vpop.permute.xlu0 %630
        %632 = vrot.lane.b32.xlu0 %v584, 84
        %v633 = vpop.permute.xlu0 %632
        %634 = vrot.lane.b32.xlu0 %v592, 84
        %v635 = vpop.permute.xlu0 %634
        %vm636 = vcmask 687104
        %v637 = vsel %vm636, %v631, %v633
        %v638 = vsel %vm636, %v633, %v635
        %v643 = vcombine.high %v586, %v586
        %644 = vrot.lane.b32.xlu0 %v584, 48
        %v645 = vpop.permute.xlu0 %644
        %646 = vrot.lane.b32.xlu0 %v589, 48
        %v647 = vpop.permute.xlu0 %646
        %648 = vrot.lane.b32.xlu0 %v586, 48
        %v649 = vpop.permute.xlu0 %648
        %650 = vrot.lane.b32.xlu0 %v643, 48
        %v651 = vpop.permute.xlu0 %650
        %vm652 = vcmask 392192
        %v653 = vsel %vm652, %v645, %v647
        %v654 = vsel %vm652, %v647, %v649
        %v655 = vsel %vm652, %v649, %v651
        %v659 = vcombine.low %v586, %v586
        %660 = vrot.lane.b32.xlu0 %v591, 46
        %v661 = vpop.permute.xlu0 %660
        %662 = vrot.lane.b32.xlu0 %v584, 46
        %v663 = vpop.permute.xlu0 %662
        %664 = vrot.lane.b32.xlu0 %v659, 46
        %v665 = vpop.permute.xlu0 %664
        %666 = vrot.lane.b32.xlu0 %v586, 46
        %v667 = vpop.permute.xlu0 %666
        %vm668 = vcmask 375808
        %v669 = vsel %vm668, %v661, %v663
        %v670 = vsel %vm668, %v663, %v665
        %v671 = vsel %vm668, %v665, %v667
        %675 = vrot.lane.b32.xlu0 %v584, 44
        %v676 = vpop.permute.xlu0 %675
        %677 = vrot.lane.b32.xlu0 %v589, 44
        %v678 = vpop.permute.xlu0 %677
        %679 = vrot.lane.b32.xlu0 %v586, 44
        %v680 = vpop.permute.xlu0 %679
        %681 = vrot.lane.b32.xlu0 %v643, 44
        %v682 = vpop.permute.xlu0 %681
        %vm683 = vcmask 359424
        %v684 = vsel %vm683, %v676, %v678
        %v685 = vsel %vm683, %v678, %v680
        %v686 = vsel %vm683, %v680, %v682
        %v687 = vsel %vm355, %v584, %v599
        %v688 = vsel %vm355, %v589, %v600
        %v689 = vsel %vm355, %v585, %v598
        %v690 = vsel %vm355, %v611, %v622
        %v691 = vsel %vm355, %v612, %v623
        %v692 = vsel %vm355, %v609, %v621
        %v693 = vsel %vm355, %v353, %v637
        %v694 = vsel %vm355, %v354, %v638
        %v695 = vsel %vm355, %v351, %v635
        %v696 = vsel %vm355, %v653, %v669
        %v697 = vsel %vm355, %v654, %v670
        %v698 = vsel %vm355, %v655, %v671
        %v699 = vld [vmem:[#allocation7] sm:$0xf]
        %v701 = vsel %vm433, %v699, 0
        %v703 = vsel %vm355, %v684, 0
        %v705 = vsel %vm355, %v685, 0
        %v707 = vsel %vm355, %v686, 0
        %709 = vmatprep.subr.mxu0 0.0
        %710 = vmatpush1.msra.mxu0 0.0
        %711 = vmatprep.subr.mxu0 0.0
        %712 = vmatpush1.msra.mxu0 0.0
        %713 = vmatprep.subr.mxu0 0.0
        %714 = vmatpush1.msra.mxu0 0.0
        %715 = vmatprep.subr.mxu0 0.0
        %716 = vmatpush1.msra.mxu0 0.0
        %717 = vmatprep.subr.mxu0 0.0
        %718 = vmatpush1.msra.mxu0 0.0
        %719 = vmatprep.subr.mxu0 0.0
        %720 = vmatpush1.msra.mxu0 0.0
        %721 = vmatprep.subr.mxu0 0.0
        %722 = vmatpush1.msra.mxu0 0.0
        %723 = vmatprep.subr.mxu0 0.0
        %724 = vmatpush1.msra.mxu0 0.0
        %725 = vmatprep.subr.mxu0 0.0
        %726 = vmatpush1.msra.mxu0 0.0
        %727 = vmatprep.subr.mxu0 0.0
        %728 = vmatpush1.msra.mxu0 0.0
        %729 = vmatprep.subr.mxu0 0.0
        %730 = vmatpush1.msra.mxu0 0.0
        %731 = vmatprep.subr.mxu0 %v705
        %732 = vmatpush1.msra.mxu0 %v703
        %733 = vmatprep.subr.mxu0 %v697
        %734 = vmatpush1.msra.mxu0 %v696
        %735 = vmatprep.subr.mxu0 %v694
        %736 = vmatpush1.msra.mxu0 %v693
        %737 = vmatprep.subr.mxu0 %v691
        %738 = vmatpush1.msra.mxu0 %v690
        %739 = vmatprep.subr.mxu0 %v688
        %740 = vmatpush1.msra.mxu0 %v687
        %741 = vmatprep.subr.mxu0 0.0
        %742 = vmatpush2.msra.mxu0 0.0
        %743 = vmatprep.subr.mxu0 0.0
        %744 = vmatpush2.msra.mxu0 0.0
        %745 = vmatprep.subr.mxu0 0.0
        %746 = vmatpush2.msra.mxu0 0.0
        %747 = vmatprep.subr.mxu0 0.0
        %748 = vmatpush2.msra.mxu0 0.0
        %749 = vmatprep.subr.mxu0 0.0
        %750 = vmatpush2.msra.mxu0 0.0
        %751 = vmatprep.subr.mxu0 0.0
        %752 = vmatpush2.msra.mxu0 0.0
        %753 = vmatprep.subr.mxu0 0.0
        %754 = vmatpush2.msra.mxu0 0.0
        %755 = vmatprep.subr.mxu0 0.0
        %756 = vmatpush2.msra.mxu0 0.0
        %757 = vmatprep.subr.mxu0 0.0
        %758 = vmatpush2.msra.mxu0 0.0
        %759 = vmatprep.subr.mxu0 0.0
        %760 = vmatpush2.msra.mxu0 0.0
        %761 = vmatprep.subr.mxu0 0.0
        %762 = vmatpush2.msra.mxu0 0.0
        %763 = vmatprep.subr.mxu0 0.0
        %764 = vmatpush2.msra.mxu0 0.0
        %765 = vmatprep.subr.mxu0 0.0
        %766 = vmatpush2.msra.mxu0 0.0
        %767 = vmatprep.subr.mxu0 0.0
        %768 = vmatpush2.msra.mxu0 0.0
        %769 = vmatprep.subr.mxu0 0.0
        %770 = vmatpush2.msra.mxu0 0.0
        %771 = vmatprep.subr.mxu0 0.0
        %772 = vmatpush2.msra.mxu0 0.0
        %773 = vmatprep.mubr.f32.mxu0 0.0
        %774 = vmatmul.mubr.f32.gmra.mxu0 %v701
        %v775 = vpop.f32.mrf.mxu0
        %v776 = vadd.f32 0.0, %v775
        %v777 = vpop.f32.mrf.mxu0
        %v778 = vadd.f32 0.0, %v777
        %779 = vdwg.mxu0
        %780 = vmatprep.subr.mxu0 0.0
        %781 = vmatpush1.msra.mxu0 0.0
        %782 = vmatprep.subr.mxu0 0.0
        %783 = vmatpush1.msra.mxu0 0.0
        %784 = vmatprep.subr.mxu0 0.0
        %785 = vmatpush1.msra.mxu0 0.0
        %786 = vmatprep.subr.mxu0 0.0
        %787 = vmatpush1.msra.mxu0 0.0
        %788 = vmatprep.subr.mxu0 0.0
        %789 = vmatpush1.msra.mxu0 0.0
        %790 = vmatprep.subr.mxu0 0.0
        %791 = vmatpush1.msra.mxu0 0.0
        %792 = vmatprep.subr.mxu0 0.0
        %793 = vmatpush1.msra.mxu0 0.0
        %794 = vmatprep.subr.mxu0 0.0
        %795 = vmatpush1.msra.mxu0 0.0
        %796 = vmatprep.subr.mxu0 0.0
        %797 = vmatpush1.msra.mxu0 0.0
        %798 = vmatprep.subr.mxu0 0.0
        %799 = vmatpush1.msra.mxu0 0.0
        %800 = vmatprep.subr.mxu0 0.0
        %801 = vmatpush1.msra.mxu0 0.0
        %802 = vmatprep.subr.mxu0 0.0
        %803 = vmatpush1.msra.mxu0 %v707
        %804 = vmatprep.subr.mxu0 0.0
        %805 = vmatpush1.msra.mxu0 %v698
        %806 = vmatprep.subr.mxu0 0.0
        %807 = vmatpush1.msra.mxu0 %v695
        %808 = vmatprep.subr.mxu0 0.0
        %809 = vmatpush1.msra.mxu0 %v692
        %810 = vmatprep.subr.mxu0 0.0
        %811 = vmatpush1.msra.mxu0 %v689
        %812 = vmatprep.subr.mxu0 0.0
        %813 = vmatpush2.msra.mxu0 0.0
        %814 = vmatprep.subr.mxu0 0.0
        %815 = vmatpush2.msra.mxu0 0.0
        %816 = vmatprep.subr.mxu0 0.0
        %817 = vmatpush2.msra.mxu0 0.0
        %818 = vmatprep.subr.mxu0 0.0
        %819 = vmatpush2.msra.mxu0 0.0
        %820 = vmatprep.subr.mxu0 0.0
        %821 = vmatpush2.msra.mxu0 0.0
        %822 = vmatprep.subr.mxu0 0.0
        %823 = vmatpush2.msra.mxu0 0.0
        %824 = vmatprep.subr.mxu0 0.0
        %825 = vmatpush2.msra.mxu0 0.0
        %826 = vmatprep.subr.mxu0 0.0
        %827 = vmatpush2.msra.mxu0 0.0
        %828 = vmatprep.subr.mxu0 0.0
        %829 = vmatpush2.msra.mxu0 0.0
        %830 = vmatprep.subr.mxu0 0.0
        %831 = vmatpush2.msra.mxu0 0.0
        %832 = vmatprep.subr.mxu0 0.0
        %833 = vmatpush2.msra.mxu0 0.0
        %834 = vmatprep.subr.mxu0 0.0
        %835 = vmatpush2.msra.mxu0 0.0
        %836 = vmatprep.subr.mxu0 0.0
        %837 = vmatpush2.msra.mxu0 0.0
        %838 = vmatprep.subr.mxu0 0.0
        %839 = vmatpush2.msra.mxu0 0.0
        %840 = vmatprep.subr.mxu0 0.0
        %841 = vmatpush2.msra.mxu0 0.0
        %842 = vmatprep.subr.mxu0 0.0
        %843 = vmatpush2.msra.mxu0 0.0
        %844 = vmatprep.mubr.f32.mxu0 0.0
        %845 = vmatmul.mubr.f32.gmra.mxu0 %v701
        %v846 = vpop.f32.mrf.mxu0
        %v847 = vadd.f32 0.0, %v846
        %v848 = vpop.f32.mrf.mxu0
        %849 = vdwg.mxu0
        %v853 = vrot.slane %v776, 4
        %v854 = vrot.slane %v778, 4
        %v855 = vrot.slane %v847, 4
        %v859 = vsel %vm355, %v510, %v853
        %v860 = vsel %vm355, %v512, %v854
        %v861 = vsel %vm355, %v581, %v855
        %v862 = vld [vmem:[#allocation8] sm:$0xff]
        %v863 = vld [vmem:[#allocation8 + $0x8] sm:$0xff]
        %v864 = vld [vmem:[#allocation8 + $0x10] sm:$0xff]
        %v865 = vld [vmem:[#allocation8 + $0x18] sm:$0xff]
        %v866 = vld [vmem:[#allocation8 + $0x20] sm:$0xff]
        %v867 = vld [vmem:[#allocation8 + $0x28] sm:$0xff]
        %v868 = vld [vmem:[#allocation8 + $0x30] sm:$0xff]
        %v869 = vld [vmem:[#allocation8 + $0x38] sm:$0xff]
        %v870 = vld [vmem:[#allocation8 + $0x40] sm:$0xff]
        %v871 = vld [vmem:[#allocation8 + $0x48] sm:$0xff]
        %v872 = vld [vmem:[#allocation8 + $0x50] sm:$0xff]
        %v873 = vld [vmem:[#allocation8 + $0x58] sm:$0xff]
        %v874 = vld [vmem:[#allocation8 + $0x60] sm:$0xff]
        %v875 = vld [vmem:[#allocation8 + $0x68] sm:$0xff]
        %v876 = vld [vmem:[#allocation8 + $0x70] sm:$0xff]
        %v877 = vld [vmem:[#allocation8 + $0x78] sm:$0xff]
        %v878 = vld [vmem:[#allocation8 + $0x80] sm:$0xff]
        %v879 = vld [vmem:[#allocation8 + $0x88] sm:$0xff]
        %v880 = vld [vmem:[#allocation8 + $0x90] sm:$0xff]
        %v881 = vld [vmem:[#allocation8 + $0x98] sm:$0xff]
        %v882 = vld [vmem:[#allocation8 + $0xa0] sm:$0xff]
        %v883 = vld [vmem:[#allocation8 + $0xa8] sm:$0xff]
        %v884 = vld [vmem:[#allocation8 + $0xb0] sm:$0xff]
        %v885 = vld [vmem:[#allocation8 + $0xb8] sm:$0xff]
        %v886 = vld [vmem:[#allocation8 + $0xc0] sm:$0xff]
        %v887 = vld [vmem:[#allocation8 + $0xc8] sm:$0xff]
        %v888 = vld [vmem:[#allocation8 + $0xd0] sm:$0xff]
        %v889 = vld [vmem:[#allocation8 + $0xd8] sm:$0xff]
        %v890 = vld [vmem:[#allocation8 + $0xe0] sm:$0xff]
        %v891 = vld [vmem:[#allocation8 + $0xe8] sm:$0xff]
        %v892 = vld [vmem:[#allocation8 + $0xf0] sm:$0xff]
        %v893 = vld [vmem:[#allocation8 + $0xf8] sm:$0xff]
        %v894 = vld [vmem:[#allocation8 + $0x100] sm:$0xff]
        %v895 = vld [vmem:[#allocation8 + $0x108] sm:$0xff]
        %v896 = vld [vmem:[#allocation8 + $0x110] sm:$0xff]
        %v897 = vld [vmem:[#allocation8 + $0x118] sm:$0xff]
        %v898 = vld [vmem:[#allocation8 + $0x120] sm:$0xff]
        %v899 = vld [vmem:[#allocation8 + $0x128] sm:$0xff]
        %v900 = vld [vmem:[#allocation8 + $0x130] sm:$0xff]
        %v901 = vld [vmem:[#allocation8 + $0x138] sm:$0xff]
        %v902 = vld [vmem:[#allocation8 + $0x140] sm:$0xff]
        %v903 = vld [vmem:[#allocation8 + $0x148] sm:$0xff]
        %v904 = vld [vmem:[#allocation8 + $0x150] sm:$0xff]
        %v905 = vld [vmem:[#allocation8 + $0x158] sm:$0xff]
        %v906 = vld [vmem:[#allocation8 + $0x160] sm:$0xff]
        %v907 = vld [vmem:[#allocation8 + $0x168] sm:$0xff]
        %v908 = vld [vmem:[#allocation8 + $0x170] sm:$0xff]
        %v909 = vld [vmem:[#allocation8 + $0x178] sm:$0xff]
        %v910 = vld [vmem:[#allocation8 + $0x180] sm:$0xff]
        %v911 = vld [vmem:[#allocation8 + $0x188] sm:$0xff]
        %v912 = vld [vmem:[#allocation8 + $0x190] sm:$0xff]
        %v913 = vld [vmem:[#allocation8 + $0x198] sm:$0xff]
        %v914 = vld [vmem:[#allocation8 + $0x1a0] sm:$0xff]
        %v915 = vld [vmem:[#allocation8 + $0x1a8] sm:$0xff]
        %v916 = vld [vmem:[#allocation8 + $0x1b0] sm:$0xff]
        %v917 = vld [vmem:[#allocation8 + $0x1b8] sm:$0xff]
        %v918 = vld [vmem:[#allocation8 + $0x1c0] sm:$0xff]
        %v919 = vld [vmem:[#allocation8 + $0x1c8] sm:$0xff]
        %v920 = vld [vmem:[#allocation8 + $0x1d0] sm:$0xff]
        %v921 = vld [vmem:[#allocation8 + $0x1d8] sm:$0xff]
        %v922 = vld [vmem:[#allocation8 + $0x1e0] sm:$0xff]
        %v923 = vld [vmem:[#allocation8 + $0x1e8] sm:$0xff]
        %v924 = vld [vmem:[#allocation8 + $0x1f0] sm:$0xff]
        %v925 = vld [vmem:[#allocation8 + $0x1f8] sm:$0xff]
        %v926 = vld [vmem:[#allocation8 + $0x200] sm:$0xff]
        %v927 = vld [vmem:[#allocation8 + $0x208] sm:$0xff]
        %v928 = vld [vmem:[#allocation8 + $0x210] sm:$0xff]
        %v929 = vld [vmem:[#allocation8 + $0x218] sm:$0xff]
        %v930 = vld [vmem:[#allocation8 + $0x220] sm:$0xff]
        %v931 = vld [vmem:[#allocation8 + $0x228] sm:$0xff]
        %v932 = vld [vmem:[#allocation8 + $0x230] sm:$0xff]
        %v933 = vld [vmem:[#allocation8 + $0x238] sm:$0xff]
        %v934 = vld [vmem:[#allocation8 + $0x240] sm:$0xff]
        %v935 = vld [vmem:[#allocation8 + $0x248] sm:$0xff]
        %v936 = vld [vmem:[#allocation8 + $0x250] sm:$0xff]
        %v937 = vld [vmem:[#allocation8 + $0x258] sm:$0xff]
        %v938 = vld [vmem:[#allocation8 + $0x260] sm:$0xff]
        %v939 = vld [vmem:[#allocation8 + $0x268] sm:$0xff]
        %v940 = vld [vmem:[#allocation8 + $0x270] sm:$0xff]
        %v941 = vld [vmem:[#allocation8 + $0x278] sm:$0xff]
        %vm942 = vcmask 523264
        %v944 = vsel %vm942, %v861, 0
        %946 = vmatprep.subr.mxu0 %v893
        %947 = vmatpush1.msra.mxu0 %v892
        %948 = vmatprep.subr.mxu0 %v891
        %949 = vmatpush1.msra.mxu0 %v890
        %950 = vmatprep.subr.mxu0 %v889
        %951 = vmatpush1.msra.mxu0 %v888
        %952 = vmatprep.subr.mxu0 %v887
        %953 = vmatpush1.msra.mxu0 %v886
        %954 = vmatprep.subr.mxu0 %v885
        %955 = vmatpush1.msra.mxu0 %v884
        %956 = vmatprep.subr.mxu0 %v883
        %957 = vmatpush1.msra.mxu0 %v882
        %958 = vmatprep.subr.mxu0 %v881
        %959 = vmatpush1.msra.mxu0 %v880
        %960 = vmatprep.subr.mxu0 %v879
        %961 = vmatpush1.msra.mxu0 %v878
        %962 = vmatprep.subr.mxu0 %v877
        %963 = vmatpush1.msra.mxu0 %v876
        %964 = vmatprep.subr.mxu0 %v875
        %965 = vmatpush1.msra.mxu0 %v874
        %966 = vmatprep.subr.mxu0 %v873
        %967 = vmatpush1.msra.mxu0 %v872
        %968 = vmatprep.subr.mxu0 %v871
        %969 = vmatpush1.msra.mxu0 %v870
        %970 = vmatprep.subr.mxu0 %v869
        %971 = vmatpush1.msra.mxu0 %v868
        %972 = vmatprep.subr.mxu0 %v867
        %973 = vmatpush1.msra.mxu0 %v866
        %974 = vmatprep.subr.mxu0 %v865
        %975 = vmatpush1.msra.mxu0 %v864
        %976 = vmatprep.subr.mxu0 %v863
        %977 = vmatpush1.msra.mxu0 %v862
        %978 = vmatprep.subr.mxu0 %v925
        %979 = vmatpush2.msra.mxu0 %v924
        %980 = vmatprep.subr.mxu0 %v923
        %981 = vmatpush2.msra.mxu0 %v922
        %982 = vmatprep.subr.mxu0 %v921
        %983 = vmatpush2.msra.mxu0 %v920
        %984 = vmatprep.subr.mxu0 %v919
        %985 = vmatpush2.msra.mxu0 %v918
        %986 = vmatprep.subr.mxu0 %v917
        %987 = vmatpush2.msra.mxu0 %v916
        %988 = vmatprep.subr.mxu0 %v915
        %989 = vmatpush2.msra.mxu0 %v914
        %990 = vmatprep.subr.mxu0 %v913
        %991 = vmatpush2.msra.mxu0 %v912
        %992 = vmatprep.subr.mxu0 %v911
        %993 = vmatpush2.msra.mxu0 %v910
        %994 = vmatprep.subr.mxu0 %v909
        %995 = vmatpush2.msra.mxu0 %v908
        %996 = vmatprep.subr.mxu0 %v907
        %997 = vmatpush2.msra.mxu0 %v906
        %998 = vmatprep.subr.mxu0 %v905
        %999 = vmatpush2.msra.mxu0 %v904
        %1000 = vmatprep.subr.mxu0 %v903
        %1001 = vmatpush2.msra.mxu0 %v902
        %1002 = vmatprep.subr.mxu0 %v901
        %1003 = vmatpush2.msra.mxu0 %v900
        %1004 = vmatprep.subr.mxu0 %v899
        %1005 = vmatpush2.msra.mxu0 %v898
        %1006 = vmatprep.subr.mxu0 %v897
        %1007 = vmatpush2.msra.mxu0 %v896
        %1008 = vmatprep.subr.mxu0 %v895
        %1009 = vmatpush2.msra.mxu0 %v894
        %1010 = vmatprep.mubr.f32.mxu0 %v860
        %1011 = vmatmul.mubr.f32.gmra.mxu0 %v859
        %v1012 = vpop.f32.mrf.mxu0
        %v1013 = vadd.f32 0.0, %v1012
        %v1014 = vpop.f32.mrf.mxu0
        %v1015 = vadd.f32 0.0, %v1014
        %1016 = vdwg.mxu0
        %1017 = vmatprep.subr.mxu0 0.0
        %1018 = vmatpush1.msra.mxu0 0.0
        %1019 = vmatprep.subr.mxu0 0.0
        %1020 = vmatpush1.msra.mxu0 0.0
        %1021 = vmatprep.subr.mxu0 0.0
        %1022 = vmatpush1.msra.mxu0 0.0
        %1023 = vmatprep.subr.mxu0 0.0
        %1024 = vmatpush1.msra.mxu0 0.0
        %1025 = vmatprep.subr.mxu0 0.0
        %1026 = vmatpush1.msra.mxu0 0.0
        %1027 = vmatprep.subr.mxu0 0.0
        %1028 = vmatpush1.msra.mxu0 0.0
        %1029 = vmatprep.subr.mxu0 0.0
        %1030 = vmatpush1.msra.mxu0 0.0
        %1031 = vmatprep.subr.mxu0 0.0
        %1032 = vmatpush1.msra.mxu0 0.0
        %1033 = vmatprep.subr.mxu0 %v941
        %1034 = vmatpush1.msra.mxu0 %v940
        %1035 = vmatprep.subr.mxu0 %v939
        %1036 = vmatpush1.msra.mxu0 %v938
        %1037 = vmatprep.subr.mxu0 %v937
        %1038 = vmatpush1.msra.mxu0 %v936
        %1039 = vmatprep.subr.mxu0 %v935
        %1040 = vmatpush1.msra.mxu0 %v934
        %1041 = vmatprep.subr.mxu0 %v933
        %1042 = vmatpush1.msra.mxu0 %v932
        %1043 = vmatprep.subr.mxu0 %v931
        %1044 = vmatpush1.msra.mxu0 %v930
        %1045 = vmatprep.subr.mxu0 %v929
        %1046 = vmatpush1.msra.mxu0 %v928
        %1047 = vmatprep.subr.mxu0 %v927
        %1048 = vmatpush1.msra.mxu0 %v926
        %1049 = vmatprep.subr.mxu0 0.0
        %1050 = vmatpush2.msra.mxu0 0.0
        %1051 = vmatprep.subr.mxu0 0.0
        %1052 = vmatpush2.msra.mxu0 0.0
        %1053 = vmatprep.subr.mxu0 0.0
        %1054 = vmatpush2.msra.mxu0 0.0
        %1055 = vmatprep.subr.mxu0 0.0
        %1056 = vmatpush2.msra.mxu0 0.0
        %1057 = vmatprep.subr.mxu0 0.0
        %1058 = vmatpush2.msra.mxu0 0.0
        %1059 = vmatprep.subr.mxu0 0.0
        %1060 = vmatpush2.msra.mxu0 0.0
        %1061 = vmatprep.subr.mxu0 0.0
        %1062 = vmatpush2.msra.mxu0 0.0
        %1063 = vmatprep.subr.mxu0 0.0
        %1064 = vmatpush2.msra.mxu0 0.0
        %1065 = vmatprep.subr.mxu0 0.0
        %1066 = vmatpush2.msra.mxu0 0.0
        %1067 = vmatprep.subr.mxu0 0.0
        %1068 = vmatpush2.msra.mxu0 0.0
        %1069 = vmatprep.subr.mxu0 0.0
        %1070 = vmatpush2.msra.mxu0 0.0
        %1071 = vmatprep.subr.mxu0 0.0
        %1072 = vmatpush2.msra.mxu0 0.0
        %1073 = vmatprep.subr.mxu0 0.0
        %1074 = vmatpush2.msra.mxu0 0.0
        %1075 = vmatprep.subr.mxu0 0.0
        %1076 = vmatpush2.msra.mxu0 0.0
        %1077 = vmatprep.subr.mxu0 0.0
        %1078 = vmatpush2.msra.mxu0 0.0
        %1079 = vmatprep.subr.mxu0 0.0
        %1080 = vmatpush2.msra.mxu0 0.0
        %1081 = vmatprep.mubr.f32.mxu0 0.0
        %1082 = vmatmul.mubr.f32.gmra.mxu0 %v944
        %v1083 = vpop.f32.mrf.mxu0
        %v1084 = vadd.f32 %v1013, %v1083
        %v1085 = vpop.f32.mrf.mxu0
        %v1086 = vadd.f32 %v1015, %v1085
        %1087 = vdwg.mxu0
        %1088 = vst [vmem:[%s253] sm:$0xff] %v1084
        %1089 = vst [vmem:[%s253 + $0x8] sm:$0xff] %v1086
        %s1090 = sand.u32 %s120, 1
        %s1091 = scalar_lea.sflag [#allocation4], %s1090
        %s1092 = sand.u32 %s120, 1
        %s1093 = smul.addr %s1092, 16
        %s1094 = scalar_lea.vmem [#allocation10], %s1093
        // Predicated region
        $region53: #{tpu_custom_call.1} parent=35 // pred_check
          %p1095 = pneg %p130
        $region54: #{tpu_custom_call.1} parent=35 // pred_check_branch
          %1097 = sbr.rel (%p1095) target = $region56
        $region55: #{tpu_custom_call.1} parent=35 // pred_region
          %s1099 = ssub.s32 256, 256
          %1100 = vsyncadd %s1091, %s1099
          %s1101 = smul.addr %s23, 2
          %s1102 = smul.addr %s1101, 128
          %s1103 = scalar_lea.hbm %s4, %s1102
          %s1105 = sshll.u32 %s1094, 4
          %s1106 = int_to_ptr.vmem [resolvable:$true] %s1105
          %1108 = dma.vmem_to_hbm [thread:$0]  %s1106, 256, %s1103, %s1091
        $region56: #{tpu_custom_call.1} parent=35 // pred_fallthru
          _
      $region36: #{tpu_custom_call.1} parent=5 // pred_fallthru
        _
      %p1109 = scmp.le.s32.totalorder 2, %s18
      // Predicated region
      $region57: #{tpu_custom_call.1} parent=5 // pred_check
        %p1110 = pneg %p1109
      $region58: #{tpu_custom_call.1} parent=5 // pred_check_branch
        %1112 = sbr.rel (%p1110) target = $region60
      $region59: #{tpu_custom_call.1} parent=5 // pred_region
        %s1113 = ssub.s32 %s18, 2
        // Predicated region
        $region61: #{tpu_custom_call.1} parent=59 // pred_check
          %p1114 = pneg %p136
        $region62: #{tpu_custom_call.1} parent=59 // pred_check_branch
          %1116 = sbr.rel (%p1114) target = $region64
        $region63: #{tpu_custom_call.1} parent=59 // pred_region
          %s1117 = sand.u32 %s121, 1
          %s1118 = scalar_lea.sflag [#allocation4], %s1117
          %s1119 = sand.u32 %s121, 1
          %s1120 = smul.addr %s1119, 16
          %s1121 = scalar_lea.vmem [#allocation10], %s1120
          %1122 = dma.done %s1118, 256
        $region64: #{tpu_custom_call.1} parent=59 // pred_fallthru
          _
      $region60: #{tpu_custom_call.1} parent=5 // pred_fallthru
        _
    $region6: #{tpu_custom_call.1} parent=1 // loop_footer
      %s22 = sadd.s32 1, %s18
    $region7: #{tpu_custom_call.1} parent=1 // loop_footer_branch
      %17 = sbr.rel target = $region3
    $region8: #{tpu_custom_call.1} parent=1 // loop_exit
      _
    %1123 = vsyncpa [#allocation3], 1
    %s1124 = scalar_lea.sflag [#allocation3], 1
    %1125 = vsyncpa %s1124, 1
    %1126 = vsyncpa [#allocation6], 1
    %1127 = vsyncpa [#allocation9], 1
    %1128 = vsyncpa [#allocation4], 1
    %s1129 = scalar_lea.sflag [#allocation4], 1
    %1130 = vsyncpa %s1129, 1

</llo_original>
